<compile_context>
chip_gen: v7x
topology: tpu7x:2x2x1
jax: 0.10.0
libtpu: 0.0.40
codegen_flags: <defaults>
</compile_context>

<pallas_src>
import jax
import jax.numpy as jnp
from jax import lax
from jax.experimental import pallas as pl
from jax.experimental.pallas import tpu as pltpu


def _round_up(x: int, m: int) -> int:
    return ((x + m - 1) // m) * m


def _vmem_budget_bytes():
    """(scoped vmem limit to request, planning budget for tile sizing)."""
    cap = None
    try:
        info = pltpu.get_tpu_info()
        cap = getattr(info, "vmem_capacity_bytes", None)
    except Exception:
        cap = None
    if not cap:
        cap = 64 * 1024 * 1024          # conservative: v7x per-core VMEM
    limit = int(cap * 0.70)             # scoped limit (below physical)
    budget = int(limit * 0.80)          # what the tile picker may plan to use
    return limit, budget


# --------------------------------------------------------------------------
# Standalone Normalize(power):  x / (x.pow(p).sum(1, keepdim).pow(1/p))
# --------------------------------------------------------------------------
def make_normalize(power: int = 2, tm: int = 512):
    """Returns a callable that Lp-normalizes each row of a 2-D array."""

    def kernel(x_ref, o_ref):
        x = x_ref[...].astype(jnp.float32)
        if power == 2:
            s = jnp.sum(x * x, axis=1, keepdims=True)
            inv = jnp.where(s > 0.0, lax.rsqrt(s), 0.0)   # EUP rsqrt, NaN-safe pad
        else:
            s = jnp.sum(x ** power, axis=1, keepdims=True)
            inv = jnp.where(s > 0.0, s ** (-1.0 / power), 0.0)
        o_ref[...] = (x * inv).astype(o_ref.dtype)         # multiply, not divide

    def normalize(x):
        n, d = x.shape
        vmem_limit, budget = _vmem_budget_bytes()
        itemsize = max(jnp.dtype(x.dtype).itemsize, 4)
        bytes_per_row = 2 * 2 * d * itemsize               # in+out, double-buffered
        max_rows = max(8, (budget // max(1, bytes_per_row)) // 8 * 8)
        tile = min(_round_up(tm, 8), _round_up(n, 8), max_rows)
        if tile >= 128:
            tile = (tile // 128) * 128
        tile = max(8, tile)
        n_pad = _round_up(n, tile)
        x_p = jnp.pad(x, ((0, n_pad - n), (0, 0))) if n_pad != n else x

        out = pl.pallas_call(
            kernel,
            out_shape=jax.ShapeDtypeStruct((n_pad, d), x.dtype),
            grid_spec=pltpu.PrefetchScalarGridSpec(
                num_scalar_prefetch=0,
                grid=(n_pad // tile,),
                in_specs=[pl.BlockSpec((tile, d), lambda i: (i, 0))],
                out_specs=pl.BlockSpec((tile, d), lambda i: (i, 0)),
            ),
            compiler_params=pltpu.CompilerParams(
                dimension_semantics=("parallel",),
                vmem_limit_bytes=vmem_limit,
            ),
        )(x_p)
        return out[:n] if n_pad != n else out

    return normalize


def normalize_ref(x, power: int = 2):
    """Pure-JAX reference mirroring the PyTorch Normalize.forward."""
    norm = jnp.power(jnp.sum(jnp.power(x, power), axis=1, keepdims=True),
                     1.0 / power)
    return x / norm


# --------------------------------------------------------------------------
# Fused Encoder forward:  L2Norm( TAGConv_k1(A_hat, h; W0, W1, b) )
# --------------------------------------------------------------------------
def _encoder_kernel(adj_ref, hrow_ref, hk_ref, w_ref, b_ref, o_ref, acc_ref):
    k = pl.program_id(1)

    @pl.when(k == 0)
    def _init():
        acc_ref[...] = jnp.zeros_like(acc_ref)

    # hop-1 aggregation: (tile, tk) @ (tk, in_dim), bf16 MXU, f32 accumulate
    acc_ref[...] += jnp.dot(adj_ref[...], hk_ref[...],
                            preferred_element_type=jnp.float32)

    @pl.when(k == pl.num_programs(1) - 1)
    def _finalize():
        cdtype = w_ref.dtype
        # single MXU pass:  [h | A_hat h] @ [W0; W1]  + b
        x = jnp.concatenate(
            [hrow_ref[...].astype(cdtype), acc_ref[...].astype(cdtype)], axis=1)
        z = jnp.dot(x, w_ref[...], preferred_element_type=jnp.float32)
        z = z + b_ref[...].astype(jnp.float32)
        # Normalize(power=2): z * rsqrt(sum(z^2)); guard zero (padded) rows.
        s = jnp.sum(z * z, axis=1, keepdims=True)
        inv = jnp.where(s > 0.0, lax.rsqrt(s), 0.0)
        o_ref[...] = (z * inv).astype(o_ref.dtype)


def _pick_tiles(n, in_dim, hidden_pad, cd_bytes, out_bytes, tm_req, tk_req,
                budget):
    """Row tile and K tile respecting VMEM budget with full accounting."""
    tk = _round_up(max(128, min(tk_req, n)), 128)
    tk = min(tk, _round_up(n, 128))
    # Resident VMEM that does not scale with the row tile.
    fixed = (2 * in_dim) * hidden_pad * cd_bytes           # stacked W
    fixed += hidden_pad * 4                                # bias (f32)
    fixed += 2 * tk * in_dim * cd_bytes                    # hk, double-buffered
    # Per-row resident bytes.
    per_row = (2 * tk * cd_bytes                           # adj, double-buffered
               + 2 * in_dim * cd_bytes                     # hrow, double-buffered
               + 2 * hidden_pad * out_bytes                # out, double-buffered
               + in_dim * 4)                               # f32 accumulator
    avail = max(0, budget - fixed)
    max_rows = max(8, (avail // max(1, per_row)) // 8 * 8)
    tile = min(_round_up(tm_req, 8), _round_up(n, 8), max_rows)
    if tile >= 128:
        tile = (tile // 128) * 128                         # MXU-M / v5e floor
    tile = max(8, tile)
    return tile, tk


def encoder_forward(adj_hat, h, w0, w1, b, *, tm: int = 512, tk: int = 512,
                    compute_dtype=jnp.bfloat16):
    """Fused TAGConv(k=1) + L2 row-normalize over a dense normalized adjacency."""
    n, in_dim = h.shape
    hidden = w0.shape[1]
    assert adj_hat.shape == (n, n)
    assert w0.shape == (in_dim, hidden) and w1.shape == (in_dim, hidden)
    assert b.shape == (hidden,)

    hidden_pad = _round_up(hidden, 128)                    # lane-dense output
    vmem_limit, budget = _vmem_budget_bytes()
    cd_bytes = jnp.dtype(compute_dtype).itemsize
    out_bytes = max(jnp.dtype(h.dtype).itemsize, 4)

    tile, tk_eff = _pick_tiles(n, in_dim, hidden_pad, cd_bytes, out_bytes,
                               tm, tk, budget)
    n_rows = _round_up(n, tile)
    n_cols = _round_up(n, tk_eff)

    # Stack weights so the finalize is a single MXU pass.
    w_stack = jnp.concatenate([w0, w1], axis=0)
    if hidden_pad != hidden:
        w_stack = jnp.pad(w_stack, ((0, 0), (0, hidden_pad - hidden)))
        b_pad = jnp.pad(b, (0, hidden_pad - hidden))
    else:
        b_pad = b
    b2 = b_pad.reshape(1, hidden_pad).astype(jnp.float32)

    adj_p = jnp.pad(adj_hat, ((0, n_rows - n), (0, n_cols - n))).astype(compute_dtype)
    h_rows = jnp.pad(h, ((0, n_rows - n), (0, 0))).astype(compute_dtype)
    h_cols = jnp.pad(h, ((0, n_cols - n), (0, 0))).astype(compute_dtype)
    w_stack = w_stack.astype(compute_dtype)

    grid = (n_rows // tile, n_cols // tk_eff)

    out = pl.pallas_call(
        _encoder_kernel,
        out_shape=jax.ShapeDtypeStruct((n_rows, hidden_pad), h.dtype),
        grid_spec=pltpu.PrefetchScalarGridSpec(
            num_scalar_prefetch=0,
            grid=grid,
            in_specs=[
                pl.BlockSpec((tile, tk_eff), lambda i, k: (i, k)),        # A_hat
                pl.BlockSpec((tile, in_dim), lambda i, k: (i, 0)),        # h rows
                pl.BlockSpec((tk_eff, in_dim), lambda i, k: (k, 0)),      # h (K tile)
                pl.BlockSpec((2 * in_dim, hidden_pad), lambda i, k: (0, 0)),  # [W0;W1]
                pl.BlockSpec((1, hidden_pad), lambda i, k: (0, 0)),       # bias
            ],
            out_specs=pl.BlockSpec((tile, hidden_pad), lambda i, k: (i, 0)),
            scratch_shapes=[pltpu.VMEM((tile, in_dim), jnp.float32)],     # A_hat@h acc
        ),
        compiler_params=pltpu.CompilerParams(
            dimension_semantics=("parallel", "arbitrary"),
            vmem_limit_bytes=vmem_limit,
        ),
    )(adj_p, h_rows, h_cols, w_stack, b2)

    if n_rows != n or hidden_pad != hidden:
        out = out[:n, :hidden]
    return out


def encoder_ref(adj_hat, h, w0, w1, b):
    """Pure-JAX reference of Encoder.forward (TAGConv k=1 + L2 normalize)."""
    z = h @ w0 + (adj_hat @ h) @ w1 + b
    return normalize_ref(z, power=2)


if __name__ == "__main__":
    key = jax.random.PRNGKey(0)
    k_adj, k_h, k_w0, k_w1, k_b = jax.random.split(key, 5)

    n, in_dim, hidden = 300, 32, 64

    # Small random undirected graph with self-loops; dense symmetric-normalized
    # adjacency A_hat = D^{-1/2} A D^{-1/2}.
    a = (jax.random.uniform(k_adj, (n, n)) < 0.1).astype(jnp.float32)
    a = jnp.maximum(a, a.T)
    a = a.at[jnp.arange(n), jnp.arange(n)].set(1.0)       # ensure nonzero degrees
    deg = jnp.sum(a, axis=1)
    d_inv_sqrt = lax.rsqrt(deg)
    adj_hat = d_inv_sqrt[:, None] * a * d_inv_sqrt[None, :]

    h = jax.random.normal(k_h, (n, in_dim), dtype=jnp.float32)
    w0 = jax.random.normal(k_w0, (in_dim, hidden), dtype=jnp.float32) * 0.1
    w1 = jax.random.normal(k_w1, (in_dim, hidden), dtype=jnp.float32) * 0.1
    b = jax.random.normal(k_b, (hidden,), dtype=jnp.float32) * 0.1

    ref = encoder_ref(adj_hat, h, w0, w1, b)

    # f32 compute path: exact semantics (tight tolerance).
    out_f32 = encoder_forward(adj_hat, h, w0, w1, b, tm=128, tk=128,
                              compute_dtype=jnp.float32)
    jax.block_until_ready(out_f32)
    assert out_f32.shape == (n, hidden) and out_f32.dtype == h.dtype
    assert jnp.allclose(out_f32, ref, atol=1e-4, rtol=1e-4), \
        "encoder (f32 compute) mismatch vs reference"

    # bf16 MXU path (default): f32 accumulation, loose tolerance vs f32 ref.
    out_bf16 = encoder_forward(adj_hat, h, w0, w1, b, tm=128, tk=128)
    jax.block_until_ready(out_bf16)
    assert out_bf16.shape == (n, hidden) and out_bf16.dtype == h.dtype
    assert jnp.allclose(out_bf16, ref, atol=2e-2, rtol=2e-2), \
        "encoder (bf16 compute) mismatch vs reference"

    # Standalone Normalize module kernel.
    normalize = make_normalize(power=2)
    xn = jax.random.normal(key, (200, 64), dtype=jnp.float32)
    out_n = normalize(xn)
    jax.block_until_ready(out_n)
    assert jnp.allclose(out_n, normalize_ref(xn, 2), atol=1e-5, rtol=1e-5), \
        "normalize mismatch vs reference"

    print("KERNEL_OK")
</pallas_src>

<mosaic_0001>
module attributes {stable_mosaic.version = 11 : i64} {
  func.func @_encoder_kernel(%arg0: i32, %arg1: i32, %arg2: memref<128x128xf32, #tpu.memory_space<vmem>>, %arg3: memref<128x32xf32, #tpu.memory_space<vmem>>, %arg4: memref<128x32xf32, #tpu.memory_space<vmem>>, %arg5: memref<64x128xf32, #tpu.memory_space<vmem>>, %arg6: memref<1x128xf32, #tpu.memory_space<vmem>>, %arg7: memref<128x128xf32, #tpu.memory_space<vmem>>, %arg8: memref<128x32xf32, #tpu.memory_space<vmem>>) attributes {dimension_semantics = [#tpu.dimension_semantics<parallel>, #tpu.dimension_semantics<arbitrary>], iteration_bounds = array<i64: 3, 3>, scalar_prefetch = 0 : i64, scratch_operands = 1 : i64, tpu.core_type = #tpu.core_type<tc>, window_params = [{transform_indices = @transform_0, window_bounds = array<i64: 128, 128>}, {transform_indices = @transform_1, window_bounds = array<i64: 128, 32>}, {transform_indices = @transform_2, window_bounds = array<i64: 128, 32>}, {pipeline_mode = #tpu.pipeline_mode<synchronous>, transform_indices = @transform_3, window_bounds = array<i64: 64, 128>}, {pipeline_mode = #tpu.pipeline_mode<synchronous>, transform_indices = @transform_4, window_bounds = array<i64: 1, 128>}, {transform_indices = @transform_5, window_bounds = array<i64: 128, 128>}]} {
    %c0_i32 = arith.constant 0 : i32
    %0 = arith.cmpi eq, %arg1, %c0_i32 : i32
    %1 = arith.extui %0 : i1 to i32
    %c0_i32_0 = arith.constant 0 : i32
    %2 = arith.cmpi ne, %1, %c0_i32_0 : i32
    scf.if %2 {
      %cst_9 = arith.constant 0.000000e+00 : f32
      %12 = vector.broadcast %cst_9 : f32 to vector<128x32xf32>
      %c0_10 = arith.constant 0 : index
      %c0_11 = arith.constant 0 : index
      %13 = vector.load %arg8[%c0_10, %c0_11] : memref<128x32xf32, #tpu.memory_space<vmem>>, vector<128x32xf32>
      tpu.vector_store %arg8[%c0_10, %c0_11], %12 {strides = array<i32>} : memref<128x32xf32, #tpu.memory_space<vmem>>, vector<128x32xf32>,
    } else {
    }
    %c0 = arith.constant 0 : index
    %c0_1 = arith.constant 0 : index
    %3 = vector.load %arg8[%c0, %c0_1] : memref<128x32xf32, #tpu.memory_space<vmem>>, vector<128x32xf32>
    %c0_2 = arith.constant 0 : index
    %c0_3 = arith.constant 0 : index
    %4 = vector.load %arg2[%c0_2, %c0_3] : memref<128x128xf32, #tpu.memory_space<vmem>>, vector<128x128xf32>
    %c0_4 = arith.constant 0 : index
    %c0_5 = arith.constant 0 : index
    %5 = vector.load %arg4[%c0_4, %c0_5] : memref<128x32xf32, #tpu.memory_space<vmem>>, vector<128x32xf32>
    %cst = arith.constant dense<0.000000e+00> : vector<128x32xf32>
    %6 = tpu.matmul %4, %5, %cst {dimension_numbers = #tpu.dot_dimension_numbers<[1], [0], [0], [1], [0, 0, 1, 1], [], []>} : vector<128x128xf32>, vector<128x32xf32>, vector<128x32xf32> -> vector<128x32xf32>
    %7 = arith.addf %3, %6 : vector<128x32xf32>
    %c0_6 = arith.constant 0 : index
    %c0_7 = arith.constant 0 : index
    %8 = vector.load %arg8[%c0_6, %c0_7] : memref<128x32xf32, #tpu.memory_space<vmem>>, vector<128x32xf32>
    tpu.vector_store %arg8[%c0_6, %c0_7], %7 {strides = array<i32>} : memref<128x32xf32, #tpu.memory_space<vmem>>, vector<128x32xf32>,
    %c2_i32 = arith.constant 2 : i32
    %9 = arith.cmpi eq, %arg1, %c2_i32 : i32
    %10 = arith.extui %9 : i1 to i32
    %c0_i32_8 = arith.constant 0 : i32
    %11 = arith.cmpi ne, %10, %c0_i32_8 : i32
    scf.if %11 {
      %c0_9 = arith.constant 0 : index
      %c0_10 = arith.constant 0 : index
      %12 = vector.load %arg3[%c0_9, %c0_10] : memref<128x32xf32, #tpu.memory_space<vmem>>, vector<128x32xf32>
      %c0_11 = arith.constant 0 : index
      %c0_12 = arith.constant 0 : index
      %13 = vector.load %arg8[%c0_11, %c0_12] : memref<128x32xf32, #tpu.memory_space<vmem>>, vector<128x32xf32>
      %14 = tpu.concatenate %12, %13 in 1 : vector<128x32xf32>, vector<128x32xf32> -> vector<128x64xf32>
      %c0_13 = arith.constant 0 : index
      %c0_14 = arith.constant 0 : index
      %15 = vector.load %arg5[%c0_13, %c0_14] : memref<64x128xf32, #tpu.memory_space<vmem>>, vector<64x128xf32>
      %cst_15 = arith.constant dense<0.000000e+00> : vector<128x128xf32>
      %16 = tpu.matmul %14, %15, %cst_15 {dimension_numbers = #tpu.dot_dimension_numbers<[1], [0], [0], [1], [0, 0, 1, 1], [], []>} : vector<128x64xf32>, vector<64x128xf32>, vector<128x128xf32> -> vector<128x128xf32>
      %c0_16 = arith.constant 0 : index
      %c0_17 = arith.constant 0 : index
      %17 = vector.load %arg6[%c0_16, %c0_17] : memref<1x128xf32, #tpu.memory_space<vmem>>, vector<1x128xf32>
      %18 = vector.broadcast %17 : vector<1x128xf32> to vector<128x128xf32>
      %19 = arith.addf %16, %18 : vector<128x128xf32>
      %20 = arith.mulf %19, %19 : vector<128x128xf32>
      %cst_18 = arith.constant dense<0.000000e+00> : vector<128xf32>
      %21 = vector.multi_reduction <add>, %20, %cst_18 [1] : vector<128x128xf32> to vector<128xf32>
      %22 = vector.shape_cast %21 : vector<128xf32> to vector<128x1xf32>
      %cst_19 = arith.constant 0.000000e+00 : f32
      %23 = vector.broadcast %cst_19 : f32 to vector<128x1xf32>
      %24 = arith.cmpf ogt, %22, %23 : vector<128x1xf32>
      %25 = math.rsqrt %22 : vector<128x1xf32>
      %cst_20 = arith.constant 0.000000e+00 : f32
      %26 = vector.broadcast %cst_20 : f32 to vector<128x1xf32>
      %27 = arith.select %24, %25, %26 : vector<128x1xi1>, vector<128x1xf32>
      %28 = vector.broadcast %27 : vector<128x1xf32> to vector<128x128xf32>
      %29 = arith.mulf %19, %28 : vector<128x128xf32>
      %c0_21 = arith.constant 0 : index
      %c0_22 = arith.constant 0 : index
      %30 = vector.load %arg7[%c0_21, %c0_22] : memref<128x128xf32, #tpu.memory_space<vmem>>, vector<128x128xf32>
      tpu.vector_store %arg7[%c0_21, %c0_22], %29 {strides = array<i32>} : memref<128x128xf32, #tpu.memory_space<vmem>>, vector<128x128xf32>,
    } else {
    }
    return
  }
  func.func @transform_0(%arg0: i32, %arg1: i32) -> (i32, i32) {
    %c0_i32 = arith.constant 0 : i32
    return %arg0, %arg1 : i32, i32
  }
  func.func @transform_1(%arg0: i32, %arg1: i32) -> (i32, i32) {
    %c0_i32 = arith.constant 0 : i32
    %c0_i32_0 = arith.constant 0 : i32
    return %arg0, %c0_i32 : i32, i32
  }
  func.func @transform_2(%arg0: i32, %arg1: i32) -> (i32, i32) {
    %c0_i32 = arith.constant 0 : i32
    %c0_i32_0 = arith.constant 0 : i32
    return %arg1, %c0_i32 : i32, i32
  }
  func.func @transform_3(%arg0: i32, %arg1: i32) -> (i32, i32) {
    %c0_i32 = arith.constant 0 : i32
    %c0_i32_0 = arith.constant 0 : i32
    %c0_i32_1 = arith.constant 0 : i32
    return %c0_i32, %c0_i32_0 : i32, i32
  }
  func.func @transform_4(%arg0: i32, %arg1: i32) -> (i32, i32) {
    %c0_i32 = arith.constant 0 : i32
    %c0_i32_0 = arith.constant 0 : i32
    %c0_i32_1 = arith.constant 0 : i32
    return %c0_i32, %c0_i32_0 : i32, i32
  }
  func.func @transform_5(%arg0: i32, %arg1: i32) -> (i32, i32) {
    %c0_i32 = arith.constant 0 : i32
    %c0_i32_0 = arith.constant 0 : i32
    return %arg0, %c0_i32 : i32, i32
  }
}

</mosaic_0001>

<llo_original>
// kernel: tpu_custom_call.1
$region0: #{tpu_custom_call.1}
  #allocation0 [shape = 'u32[]', space=smem, size = 0x4, offset = 0x4, fixed_abs, tag = 'smem constant byte address 0x4 - core index']
  #allocation1 [shape = 'u32[144,128]{1,0:T(1,128)}', space=vmem, size = 0x12000, scoped, tag = 'internal scratch']
  #allocation2 [shape = 'f32[128,32]{1,0:T(8,128)}', space=vmem, size = 0x10000, scoped, tag = 'scratch operand']
  %s0 = inlined_call_operand.hbm [shape: f32[384,384], index: 0, kind: input, shape index: {}]
  %s1 = inlined_call_operand.vmem [shape: f32[384,32], index: 1, kind: input, shape index: {}]
  %s2 = inlined_call_operand.vmem [shape: f32[384,32], index: 2, kind: input, shape index: {}]
  %s3 = inlined_call_operand.vmem [shape: f32[64,128], index: 3, kind: input, shape index: {}]
  %s4 = inlined_call_operand.vmem [shape: f32[1,128], index: 4, kind: input, shape index: {}]
  %s5 = inlined_call_operand.hbm [shape: f32[384,128], index: 5, kind: output, shape index: {}]
  %s6 = sld [smem:[#allocation0]]
  $region65: #{tpu_custom_call.1} parent=0
    _
  %s8 = ssub.s32 1, %s6
  %s9 = scalar_select 0, %s8, %s6
  $region1: #{tpu_custom_call.1} parent=0
    #allocation3 [shape = 'u8[131072]{0}', space=vmem, size = 0x20000, scoped, tag = 'input window, operand 0']
    #allocation4 [shape = 's32[2]{0}', space=sflag, size = 0x8, scoped, tag = 'scoped memory for tpu_custom_call.1']
    #allocation5 [shape = 's32[2]{0}', space=sflag, size = 0x8, scoped, tag = 'scoped memory for tpu_custom_call.1']
    #allocation6 [shape = 'u8[131072]{0}', space=vmem, size = 0x20000, scoped, tag = 'output window, operand 0']
    %10 = vsyncpa [#allocation4], 0
    %s11 = scalar_lea.sflag [#allocation4], 1
    %12 = vsyncpa %s11, 0
    %13 = vsyncpa [#allocation5], 0
    %s14 = scalar_lea.sflag [#allocation5], 1
    %15 = vsyncpa %s14, 0
    loop: start=0, step=1, limit=11
    $region2: #{tpu_custom_call.1} parent=1 // loop_pre_header
      _
    $region3: #{tpu_custom_call.1} parent=1 // loop_header
      %s17 = sphi 0, %s21
      %p18 = scmp.ge.s32.totalorder %s17, 11
      %s24 = sphi 0, %s36
      %s25 = sphi 0, %s32
      %s26 = sphi 0, %s24
      %s27 = sphi 0, %s25
      %s28 = sphi 0, %s26
      %s29 = sphi 0, %s27
      %s41 = sphi 0, %s43
      %s44 = sphi 0, %s41
      %s45 = sphi 0, %s44
      %s61 = sphi 0, %s45
      %s67 = sphi 0, %s69
      %s70 = sphi 0, %s67
      %s71 = sphi 0, %s70
      %s87 = sphi 0, %s71
      %s93 = sphi 0, %s95
      %s96 = sphi 0, %s93
      %s97 = sphi 0, %s96
      %s113 = sphi 0, %s97
      %s117 = sphi 0, %s117
      %s119 = sphi 0, %s117
      %s120 = sphi 0, %s119
      %s134 = sphi 0, %s120
      %s138 = sphi 0, %s138
      %s140 = sphi 0, %s138
      %s141 = sphi 0, %s140
      %s155 = sphi 0, %s141
      %s161 = sphi 0, %s163
      %s164 = sphi 0, %s161
      %s165 = sphi 0, %s164
      %s181 = sphi 0, %s165
    $region4: #{tpu_custom_call.1} parent=1 // loop_header_branch
      %20 = sbr.rel (%p18) target = $region8
    $region5: #{tpu_custom_call.1} parent=1 // loop_body
      %s22 = ssub.s32 %s17, 1
      %s23 = ssub.s32 %s17, 2
      %s30 = sadd.s32 1, %s25
      %p31 = scmp.ge.s32.totalorder %s30, 3
      %s32 = scalar_select %p31, 0, %s30
      %s33 = sadd.s32 1, %s24
      %s34 = scalar_select %p31, %s33, %s24
      %p35 = scmp.ge.s32.totalorder %s34, 3
      %s36 = scalar_select %p35, 0, %s34
      %s37 = ssub.s32 %s24, %s36
      %s38 = ssub.s32 %s25, %s32
      %s39 = sor.u32 %s37, %s38
      %p40 = scmp.eq.s32.totalorder %s39, 0
      %s42 = sadd.s32 %s41, 1
      %s43 = scalar_select %p40, %s41, %s42
      %p46 = pneg %p40
      %p47 = scmp.eq.s32.totalorder %s17, 8
      %p48 = por %p46, %p47
      %p49 = scmp.ne.s32.totalorder %s41, %s44
      %p50 = scmp.eq.s32.totalorder %s17, 0
      %p51 = por %p49, %p50
      %p52 = scmp.ne.s32.totalorder %s41, %s44
      %p53 = scmp.eq.s32.totalorder %s22, 8
      %p54 = por %p52, %p53
      %p55 = scmp.ne.s32.totalorder %s44, %s45
      %p56 = scmp.eq.s32.totalorder %s22, 0
      %p57 = por %p55, %p56
      %p58 = scmp.ne.s32.totalorder %s44, %s45
      %p59 = scmp.eq.s32.totalorder %s23, 8
      %p60 = por %p58, %p59
      %p62 = scmp.ne.s32.totalorder %s45, %s61
      %p63 = scmp.eq.s32.totalorder %s23, 0
      %p64 = por %p62, %p63
      %s65 = ssub.s32 %s24, %s36
      %p66 = scmp.eq.s32.totalorder %s65, 0
      %s68 = sadd.s32 %s67, 1
      %s69 = scalar_select %p66, %s67, %s68
      %p72 = pneg %p66
      %p73 = scmp.eq.s32.totalorder %s17, 8
      %p74 = por %p72, %p73
      %p75 = scmp.ne.s32.totalorder %s67, %s70
      %p76 = scmp.eq.s32.totalorder %s17, 0
      %p77 = por %p75, %p76
      %p78 = scmp.ne.s32.totalorder %s67, %s70
      %p79 = scmp.eq.s32.totalorder %s22, 8
      %p80 = por %p78, %p79
      %p81 = scmp.ne.s32.totalorder %s70, %s71
      %p82 = scmp.eq.s32.totalorder %s22, 0
      %p83 = por %p81, %p82
      %p84 = scmp.ne.s32.totalorder %s70, %s71
      %p85 = scmp.eq.s32.totalorder %s23, 8
      %p86 = por %p84, %p85
      %p88 = scmp.ne.s32.totalorder %s71, %s87
      %p89 = scmp.eq.s32.totalorder %s23, 0
      %p90 = por %p88, %p89
      %s91 = ssub.s32 %s25, %s32
      %p92 = scmp.eq.s32.totalorder %s91, 0
      %s94 = sadd.s32 %s93, 1
      %s95 = scalar_select %p92, %s93, %s94
      %p98 = pneg %p92
      %p99 = scmp.eq.s32.totalorder %s17, 8
      %p100 = por %p98, %p99
      %p101 = scmp.ne.s32.totalorder %s93, %s96
      %p102 = scmp.eq.s32.totalorder %s17, 0
      %p103 = por %p101, %p102
      %p104 = scmp.ne.s32.totalorder %s93, %s96
      %p105 = scmp.eq.s32.totalorder %s22, 8
      %p106 = por %p104, %p105
      %p107 = scmp.ne.s32.totalorder %s96, %s97
      %p108 = scmp.eq.s32.totalorder %s22, 0
      %p109 = por %p107, %p108
      %p110 = scmp.ne.s32.totalorder %s96, %s97
      %p111 = scmp.eq.s32.totalorder %s23, 8
      %p112 = por %p110, %p111
      %p114 = scmp.ne.s32.totalorder %s97, %s113
      %p115 = scmp.eq.s32.totalorder %s23, 0
      %p116 = por %p114, %p115
      %s118 = sadd.s32 %s117, 1
      %p121 = scmp.eq.s32.totalorder %s17, 8
      %p122 = scmp.ne.s32.totalorder %s117, %s119
      %p123 = scmp.eq.s32.totalorder %s17, 0
      %p124 = por %p122, %p123
      %p125 = scmp.ne.s32.totalorder %s117, %s119
      %p126 = scmp.eq.s32.totalorder %s22, 8
      %p127 = por %p125, %p126
      %p128 = scmp.ne.s32.totalorder %s119, %s120
      %p129 = scmp.eq.s32.totalorder %s22, 0
      %p130 = por %p128, %p129
      %p131 = scmp.ne.s32.totalorder %s119, %s120
      %p132 = scmp.eq.s32.totalorder %s23, 8
      %p133 = por %p131, %p132
      %p135 = scmp.ne.s32.totalorder %s120, %s134
      %p136 = scmp.eq.s32.totalorder %s23, 0
      %p137 = por %p135, %p136
      %s139 = sadd.s32 %s138, 1
      %p142 = scmp.eq.s32.totalorder %s17, 8
      %p143 = scmp.ne.s32.totalorder %s138, %s140
      %p144 = scmp.eq.s32.totalorder %s17, 0
      %p145 = por %p143, %p144
      %p146 = scmp.ne.s32.totalorder %s138, %s140
      %p147 = scmp.eq.s32.totalorder %s22, 8
      %p148 = por %p146, %p147
      %p149 = scmp.ne.s32.totalorder %s140, %s141
      %p150 = scmp.eq.s32.totalorder %s22, 0
      %p151 = por %p149, %p150
      %p152 = scmp.ne.s32.totalorder %s140, %s141
      %p153 = scmp.eq.s32.totalorder %s23, 8
      %p154 = por %p152, %p153
      %p156 = scmp.ne.s32.totalorder %s141, %s155
      %p157 = scmp.eq.s32.totalorder %s23, 0
      %p158 = por %p156, %p157
      %s159 = ssub.s32 %s24, %s36
      %p160 = scmp.eq.s32.totalorder %s159, 0
      %s162 = sadd.s32 %s161, 1
      %s163 = scalar_select %p160, %s161, %s162
      %p166 = pneg %p160
      %p167 = scmp.eq.s32.totalorder %s17, 8
      %p168 = por %p166, %p167
      %p169 = scmp.ne.s32.totalorder %s161, %s164
      %p170 = scmp.eq.s32.totalorder %s17, 0
      %p171 = por %p169, %p170
      %p172 = scmp.ne.s32.totalorder %s161, %s164
      %p173 = scmp.eq.s32.totalorder %s22, 8
      %p174 = por %p172, %p173
      %p175 = scmp.ne.s32.totalorder %s164, %s165
      %p176 = scmp.eq.s32.totalorder %s22, 0
      %p177 = por %p175, %p176
      %p178 = scmp.ne.s32.totalorder %s164, %s165
      %p179 = scmp.eq.s32.totalorder %s23, 8
      %p180 = por %p178, %p179
      %p182 = scmp.ne.s32.totalorder %s165, %s181
      %p183 = scmp.eq.s32.totalorder %s23, 0
      %p184 = por %p182, %p183
      %p185 = scmp.le.s32.totalorder 1, %s17
      %p186 = scmp.lt.s32.totalorder %s17, 10
      %p187 = pnand %p185, %p186
      %p188 = pneg %p187
      // Predicated region
      $region9: #{tpu_custom_call.1} parent=5 // pred_check
        _
      $region10: #{tpu_custom_call.1} parent=5 // pred_check_branch
        %190 = sbr.rel (%p187) target = $region12
      $region11: #{tpu_custom_call.1} parent=5 // pred_region
        %s191 = ssub.s32 %s17, 1
        // Predicated region
        $region13: #{tpu_custom_call.1} parent=11 // pred_check
          %p192 = pneg %p130
        $region14: #{tpu_custom_call.1} parent=11 // pred_check_branch
          %194 = sbr.rel (%p192) target = $region16
        $region15: #{tpu_custom_call.1} parent=11 // pred_region
          _
        $region16: #{tpu_custom_call.1} parent=11 // pred_fallthru
          _
        // Predicated region
        $region17: #{tpu_custom_call.1} parent=11 // pred_check
          %p195 = pneg %p151
        $region18: #{tpu_custom_call.1} parent=11 // pred_check_branch
          %197 = sbr.rel (%p195) target = $region20
        $region19: #{tpu_custom_call.1} parent=11 // pred_region
          _
        $region20: #{tpu_custom_call.1} parent=11 // pred_fallthru
          _
      $region12: #{tpu_custom_call.1} parent=5 // pred_fallthru
        _
      %p198 = scmp.lt.s32.totalorder %s17, 9
      // Predicated region
      $region21: #{tpu_custom_call.1} parent=5 // pred_check
        %p199 = pneg %p198
      $region22: #{tpu_custom_call.1} parent=5 // pred_check_branch
        %201 = sbr.rel (%p199) target = $region24
      $region23: #{tpu_custom_call.1} parent=5 // pred_region
        // Predicated region
        $region25: #{tpu_custom_call.1} parent=23 // pred_check
          %p202 = pneg %p51
        $region26: #{tpu_custom_call.1} parent=23 // pred_check_branch
          %204 = sbr.rel (%p202) target = $region28
        $region27: #{tpu_custom_call.1} parent=23 // pred_region
          %s205 = sand.u32 %s41, 1
          %s206 = scalar_lea.sflag [#allocation4], %s205
          %s207 = sand.u32 %s41, 1
          %s208 = smul.addr %s207, 128
          %s209 = scalar_lea.vmem [#allocation3], %s208
          %s210 = smul.u32 16, %s24
          %s212 = ssub.s32 2048, 2048
          %213 = vsyncadd %s206, %s212
          %s214 = smul.addr %s210, 3
          %s215 = sadd.s32 %s25, %s214
          %s216 = smul.addr %s215, 128
          %s217 = scalar_lea.hbm %s0, %s216
          %s218 = sshll.u32 %s209, 4
          %s219 = int_to_ptr.vmem [resolvable:$true] %s218
          %224 = dma.hbm_to_vmem [thread:$0]  %s217, 2048, %s219, %s206, 384, 128, 8
        $region28: #{tpu_custom_call.1} parent=23 // pred_fallthru
          _
        // Predicated region
        $region29: #{tpu_custom_call.1} parent=23 // pred_check
          %p225 = pneg %p77
        $region30: #{tpu_custom_call.1} parent=23 // pred_check_branch
          %227 = sbr.rel (%p225) target = $region32
        $region31: #{tpu_custom_call.1} parent=23 // pred_region
          %s228 = smul.u32 16, %s24
          %p229 = scmp.lt.s32.totalorder %s228, 47
          %s230 = scalar_select %p229, %s228, 47
          %s231 = smul.addr %s230, 8
          %s232 = scalar_lea.vmem %s1, %s231
          %s233 = smul.u32 16, %s24
        $region32: #{tpu_custom_call.1} parent=23 // pred_fallthru
          _
        // Predicated region
        $region33: #{tpu_custom_call.1} parent=23 // pred_check
          %p234 = pneg %p103
        $region34: #{tpu_custom_call.1} parent=23 // pred_check_branch
          %236 = sbr.rel (%p234) target = $region36
        $region35: #{tpu_custom_call.1} parent=23 // pred_region
          %s237 = smul.u32 16, %s25
          %p238 = scmp.lt.s32.totalorder %s237, 47
          %s239 = scalar_select %p238, %s237, 47
          %s240 = smul.addr %s239, 8
          %s241 = scalar_lea.vmem %s2, %s240
          %s242 = smul.u32 16, %s25
        $region36: #{tpu_custom_call.1} parent=23 // pred_fallthru
          _
      $region24: #{tpu_custom_call.1} parent=5 // pred_fallthru
        _
      %p243 = scmp.le.s32.totalorder 1, %s17
      %p244 = scmp.lt.s32.totalorder %s17, 10
      %p245 = pnand %p243, %p244
      %p246 = pneg %p245
      // Predicated region
      $region37: #{tpu_custom_call.1} parent=5 // pred_check
        _
      $region38: #{tpu_custom_call.1} parent=5 // pred_check_branch
        %248 = sbr.rel (%p245) target = $region40
      $region39: #{tpu_custom_call.1} parent=5 // pred_region
        %s249 = ssub.s32 %s17, 1
        %s250 = sand.u32 %s44, 1
        %s251 = scalar_lea.sflag [#allocation4], %s250
        %s252 = sand.u32 %s44, 1
        %s253 = smul.addr %s252, 128
        %s254 = scalar_lea.vmem [#allocation3], %s253
        // Predicated region
        $region41: #{tpu_custom_call.1} parent=39 // pred_check
          %p255 = pneg %p57
        $region42: #{tpu_custom_call.1} parent=39 // pred_check_branch
          %257 = sbr.rel (%p255) target = $region44
        $region43: #{tpu_custom_call.1} parent=39 // pred_region
          %258 = dma.done %s251, 2048
        $region44: #{tpu_custom_call.1} parent=39 // pred_fallthru
          _
        %s259 = sand.u32 %s44, 1
        %s260 = scalar_lea.sflag [#allocation4], %s259
        %s261 = sand.u32 %s44, 1
        %s262 = smul.addr %s261, 128
        %s263 = scalar_lea.vmem [#allocation3], %s262
        %p264 = pneg %p57
        %p265 = pneg %p54
        %s266 = smul.u32 16, %s26
        %p267 = scmp.lt.s32.totalorder %s266, 47
        %s268 = scalar_select %p267, %s266, 47
        %s269 = smul.addr %s268, 8
        %s270 = scalar_lea.vmem %s1, %s269
        %p271 = pneg %p83
        %p272 = pneg %p80
        %s273 = smul.u32 16, %s27
        %p274 = scmp.lt.s32.totalorder %s273, 47
        %s275 = scalar_select %p274, %s273, 47
        %s276 = smul.addr %s275, 8
        %s277 = scalar_lea.vmem %s2, %s276
        %p278 = pneg %p109
        %p279 = pneg %p106
        %p280 = pneg %p130
        %p281 = pneg %p127
        %p282 = pneg %p151
        %p283 = pneg %p148
        %p284 = pneg %p177
        %p285 = pneg %p174
        %s286 = sand.u32 %s164, 1
        %s287 = scalar_lea.sflag [#allocation5], %s286
        %s288 = sand.u32 %s164, 1
        %s289 = smul.addr %s288, 128
        %s290 = scalar_lea.vmem [#allocation6], %s289
        %s291 = smul.u32 16, %s26
        %s292 = smul.u32 16, %s26
        %p293 = scmp.lt.s32.totalorder %s292, 47
        %s294 = scalar_select %p293, %s292, 47
        %s295 = smul.addr %s294, 8
        %s296 = scalar_lea.vmem %s1, %s295
        %s297 = smul.u32 16, %s26
        %s298 = smul.u32 16, %s27
        %p299 = scmp.lt.s32.totalorder %s298, 47
        %s300 = scalar_select %p299, %s298, 47
        %s301 = smul.addr %s300, 8
        %s302 = scalar_lea.vmem %s2, %s301
        %s303 = smul.u32 16, %s27
        %s304 = smul.u32 16, %s26
        %p305 = scmp.eq.s32.totalorder %s27, 0
        // Predicated region
        $region45: #{tpu_custom_call.1} parent=39 // pred_check
          %p306 = pneg %p305
        $region46: #{tpu_custom_call.1} parent=39 // pred_check_branch
          %308 = sbr.rel (%p306) target = $region48
        $region47: #{tpu_custom_call.1} parent=39 // pred_region
          %vm309 = vcmask 261120
          %310 = vst.msk [vmem:[#allocation2] sm:$0xff] %vm309, 0.0
          %311 = vst.msk [vmem:[#allocation2 + $0x8] sm:$0xff] %vm309, 0.0
          %312 = vst.msk [vmem:[#allocation2 + $0x10] sm:$0xff] %vm309, 0.0
          %313 = vst.msk [vmem:[#allocation2 + $0x18] sm:$0xff] %vm309, 0.0
          %314 = vst.msk [vmem:[#allocation2 + $0x20] sm:$0xff] %vm309, 0.0
          %315 = vst.msk [vmem:[#allocation2 + $0x28] sm:$0xff] %vm309, 0.0
          %316 = vst.msk [vmem:[#allocation2 + $0x30] sm:$0xff] %vm309, 0.0
          %317 = vst.msk [vmem:[#allocation2 + $0x38] sm:$0xff] %vm309, 0.0
          %318 = vst.msk [vmem:[#allocation2 + $0x40] sm:$0xff] %vm309, 0.0
          %319 = vst.msk [vmem:[#allocation2 + $0x48] sm:$0xff] %vm309, 0.0
          %320 = vst.msk [vmem:[#allocation2 + $0x50] sm:$0xff] %vm309, 0.0
          %321 = vst.msk [vmem:[#allocation2 + $0x58] sm:$0xff] %vm309, 0.0
          %322 = vst.msk [vmem:[#allocation2 + $0x60] sm:$0xff] %vm309, 0.0
          %323 = vst.msk [vmem:[#allocation2 + $0x68] sm:$0xff] %vm309, 0.0
          %324 = vst.msk [vmem:[#allocation2 + $0x70] sm:$0xff] %vm309, 0.0
          %325 = vst.msk [vmem:[#allocation2 + $0x78] sm:$0xff] %vm309, 0.0
        $region48: #{tpu_custom_call.1} parent=39 // pred_fallthru
          _
        %v326 = vld [vmem:[#allocation2] sm:$0xff]
        %v327 = vld [vmem:[#allocation2 + $0x8] sm:$0xff]
        %v328 = vld [vmem:[#allocation2 + $0x10] sm:$0xff]
        %v329 = vld [vmem:[#allocation2 + $0x18] sm:$0xff]
        %v330 = vld [vmem:[#allocation2 + $0x20] sm:$0xff]
        %v331 = vld [vmem:[#allocation2 + $0x28] sm:$0xff]
        %v332 = vld [vmem:[#allocation2 + $0x30] sm:$0xff]
        %v333 = vld [vmem:[#allocation2 + $0x38] sm:$0xff]
        %v334 = vld [vmem:[#allocation2 + $0x40] sm:$0xff]
        %v335 = vld [vmem:[#allocation2 + $0x48] sm:$0xff]
        %v336 = vld [vmem:[#allocation2 + $0x50] sm:$0xff]
        %v337 = vld [vmem:[#allocation2 + $0x58] sm:$0xff]
        %v338 = vld [vmem:[#allocation2 + $0x60] sm:$0xff]
        %v339 = vld [vmem:[#allocation2 + $0x68] sm:$0xff]
        %v340 = vld [vmem:[#allocation2 + $0x70] sm:$0xff]
        %v341 = vld [vmem:[#allocation2 + $0x78] sm:$0xff]
        %v342 = vld [vmem:[%s254] sm:$0xff]
        %v343 = vld [vmem:[%s254 + $0x8] sm:$0xff]
        %v344 = vld [vmem:[%s254 + $0x10] sm:$0xff]
        %v345 = vld [vmem:[%s254 + $0x18] sm:$0xff]
        %v346 = vld [vmem:[%s254 + $0x20] sm:$0xff]
        %v347 = vld [vmem:[%s254 + $0x28] sm:$0xff]
        %v348 = vld [vmem:[%s254 + $0x30] sm:$0xff]
        %v349 = vld [vmem:[%s254 + $0x38] sm:$0xff]
        %v350 = vld [vmem:[%s254 + $0x40] sm:$0xff]
        %v351 = vld [vmem:[%s254 + $0x48] sm:$0xff]
        %v352 = vld [vmem:[%s254 + $0x50] sm:$0xff]
        %v353 = vld [vmem:[%s254 + $0x58] sm:$0xff]
        %v354 = vld [vmem:[%s254 + $0x60] sm:$0xff]
        %v355 = vld [vmem:[%s254 + $0x68] sm:$0xff]
        %v356 = vld [vmem:[%s254 + $0x70] sm:$0xff]
        %v357 = vld [vmem:[%s254 + $0x78] sm:$0xff]
        %v358 = vld [vmem:[%s302] sm:$0xff]
        %v359 = vld [vmem:[%s302 + $0x8] sm:$0xff]
        %v360 = vld [vmem:[%s302 + $0x10] sm:$0xff]
        %v361 = vld [vmem:[%s302 + $0x18] sm:$0xff]
        %v362 = vld [vmem:[%s302 + $0x20] sm:$0xff]
        %v363 = vld [vmem:[%s302 + $0x28] sm:$0xff]
        %v364 = vld [vmem:[%s302 + $0x30] sm:$0xff]
        %v365 = vld [vmem:[%s302 + $0x38] sm:$0xff]
        %v366 = vld [vmem:[%s302 + $0x40] sm:$0xff]
        %v367 = vld [vmem:[%s302 + $0x48] sm:$0xff]
        %v368 = vld [vmem:[%s302 + $0x50] sm:$0xff]
        %v369 = vld [vmem:[%s302 + $0x58] sm:$0xff]
        %v370 = vld [vmem:[%s302 + $0x60] sm:$0xff]
        %v371 = vld [vmem:[%s302 + $0x68] sm:$0xff]
        %v372 = vld [vmem:[%s302 + $0x70] sm:$0xff]
        %v373 = vld [vmem:[%s302 + $0x78] sm:$0xff]
        %374 = vmatprep.subr.mxu0 0.0
        %375 = vmatpush1.msra.mxu0 %v358
        %376 = vmatprep.subr.mxu0 0.0
        %377 = vmatpush1.msra.mxu0 %v359
        %378 = vmatprep.subr.mxu0 0.0
        %379 = vmatpush1.msra.mxu0 %v360
        %380 = vmatprep.subr.mxu0 0.0
        %381 = vmatpush1.msra.mxu0 %v361
        %382 = vmatprep.subr.mxu0 0.0
        %383 = vmatpush1.msra.mxu0 %v362
        %384 = vmatprep.subr.mxu0 0.0
        %385 = vmatpush1.msra.mxu0 %v363
        %386 = vmatprep.subr.mxu0 0.0
        %387 = vmatpush1.msra.mxu0 %v364
        %388 = vmatprep.subr.mxu0 0.0
        %389 = vmatpush1.msra.mxu0 %v365
        %390 = vmatprep.subr.mxu0 0.0
        %391 = vmatpush1.msra.mxu0 %v366
        %392 = vmatprep.subr.mxu0 0.0
        %393 = vmatpush1.msra.mxu0 %v367
        %394 = vmatprep.subr.mxu0 0.0
        %395 = vmatpush1.msra.mxu0 %v368
        %396 = vmatprep.subr.mxu0 0.0
        %397 = vmatpush1.msra.mxu0 %v369
        %398 = vmatprep.subr.mxu0 0.0
        %399 = vmatpush1.msra.mxu0 %v370
        %400 = vmatprep.subr.mxu0 0.0
        %401 = vmatpush1.msra.mxu0 %v371
        %402 = vmatprep.subr.mxu0 0.0
        %403 = vmatpush1.msra.mxu0 %v372
        %404 = vmatprep.subr.mxu0 0.0
        %405 = vmatpush1.msra.mxu0 %v373
        %406 = vmatprep.subr.mxu0 0.0
        %407 = vmatpush1.msra.mxu0 0.0
        %408 = vmatprep.subr.mxu0 0.0
        %409 = vmatpush1.msra.mxu0 0.0
        %410 = vmatprep.subr.mxu0 0.0
        %411 = vmatpush1.msra.mxu0 0.0
        %412 = vmatprep.subr.mxu0 0.0
        %413 = vmatpush1.msra.mxu0 0.0
        %414 = vmatprep.subr.mxu0 0.0
        %415 = vmatpush1.msra.mxu0 0.0
        %416 = vmatprep.subr.mxu0 0.0
        %417 = vmatpush1.msra.mxu0 0.0
        %418 = vmatprep.subr.mxu0 0.0
        %419 = vmatpush1.msra.mxu0 0.0
        %420 = vmatprep.subr.mxu0 0.0
        %421 = vmatpush1.msra.mxu0 0.0
        %422 = vmatprep.subr.mxu0 0.0
        %423 = vmatpush1.msra.mxu0 0.0
        %424 = vmatprep.subr.mxu0 0.0
        %425 = vmatpush1.msra.mxu0 0.0
        %426 = vmatprep.subr.mxu0 0.0
        %427 = vmatpush1.msra.mxu0 0.0
        %428 = vmatprep.subr.mxu0 0.0
        %429 = vmatpush1.msra.mxu0 0.0
        %430 = vmatprep.subr.mxu0 0.0
        %431 = vmatpush1.msra.mxu0 0.0
        %432 = vmatprep.subr.mxu0 0.0
        %433 = vmatpush1.msra.mxu0 0.0
        %434 = vmatprep.subr.mxu0 0.0
        %435 = vmatpush1.msra.mxu0 0.0
        %436 = vmatprep.subr.mxu0 0.0
        %437 = vmatpush1.msra.mxu0 0.0
        %438 = vmatprep.mubr.f32.mxu0 0.0
        %439 = vmatmul.mubr.f32.gmra.mrb[0].mxu0 %v342
        %v440 = vpop.f32.mrb[0].mxu0
        %v441 = vadd.f32 0.0, %v440
        %v442 = vpop.f32.mrb[0].mxu0
        %443 = vmatprep.mubr.f32.mxu0 0.0
        %444 = vmatmul.mubr.f32.gmra.mrb[0].mxu0 %v343
        %v445 = vpop.f32.mrb[0].mxu0
        %v446 = vadd.f32 0.0, %v445
        %v447 = vpop.f32.mrb[0].mxu0
        %448 = vmatprep.mubr.f32.mxu0 0.0
        %449 = vmatmul.mubr.f32.gmra.mrb[0].mxu0 %v344
        %v450 = vpop.f32.mrb[0].mxu0
        %v451 = vadd.f32 0.0, %v450
        %v452 = vpop.f32.mrb[0].mxu0
        %453 = vmatprep.mubr.f32.mxu0 0.0
        %454 = vmatmul.mubr.f32.gmra.mrb[0].mxu0 %v345
        %v455 = vpop.f32.mrb[0].mxu0
        %v456 = vadd.f32 0.0, %v455
        %v457 = vpop.f32.mrb[0].mxu0
        %458 = vmatprep.mubr.f32.mxu0 0.0
        %459 = vmatmul.mubr.f32.gmra.mrb[0].mxu0 %v346
        %v460 = vpop.f32.mrb[0].mxu0
        %v461 = vadd.f32 0.0, %v460
        %v462 = vpop.f32.mrb[0].mxu0
        %463 = vmatprep.mubr.f32.mxu0 0.0
        %464 = vmatmul.mubr.f32.gmra.mrb[0].mxu0 %v347
        %v465 = vpop.f32.mrb[0].mxu0
        %v466 = vadd.f32 0.0, %v465
        %v467 = vpop.f32.mrb[0].mxu0
        %468 = vmatprep.mubr.f32.mxu0 0.0
        %469 = vmatmul.mubr.f32.gmra.mrb[0].mxu0 %v348
        %v470 = vpop.f32.mrb[0].mxu0
        %v471 = vadd.f32 0.0, %v470
        %v472 = vpop.f32.mrb[0].mxu0
        %473 = vmatprep.mubr.f32.mxu0 0.0
        %474 = vmatmul.mubr.f32.gmra.mrb[0].mxu0 %v349
        %v475 = vpop.f32.mrb[0].mxu0
        %v476 = vadd.f32 0.0, %v475
        %v477 = vpop.f32.mrb[0].mxu0
        %478 = vmatprep.mubr.f32.mxu0 0.0
        %479 = vmatmul.mubr.f32.gmra.mrb[0].mxu0 %v350
        %v480 = vpop.f32.mrb[0].mxu0
        %v481 = vadd.f32 0.0, %v480
        %v482 = vpop.f32.mrb[0].mxu0
        %483 = vmatprep.mubr.f32.mxu0 0.0
        %484 = vmatmul.mubr.f32.gmra.mrb[0].mxu0 %v351
        %v485 = vpop.f32.mrb[0].mxu0
        %v486 = vadd.f32 0.0, %v485
        %v487 = vpop.f32.mrb[0].mxu0
        %488 = vmatprep.mubr.f32.mxu0 0.0
        %489 = vmatmul.mubr.f32.gmra.mrb[0].mxu0 %v352
        %v490 = vpop.f32.mrb[0].mxu0
        %v491 = vadd.f32 0.0, %v490
        %v492 = vpop.f32.mrb[0].mxu0
        %493 = vmatprep.mubr.f32.mxu0 0.0
        %494 = vmatmul.mubr.f32.gmra.mrb[0].mxu0 %v353
        %v495 = vpop.f32.mrb[0].mxu0
        %v496 = vadd.f32 0.0, %v495
        %v497 = vpop.f32.mrb[0].mxu0
        %498 = vmatprep.mubr.f32.mxu0 0.0
        %499 = vmatmul.mubr.f32.gmra.mrb[0].mxu0 %v354
        %v500 = vpop.f32.mrb[0].mxu0
        %v501 = vadd.f32 0.0, %v500
        %v502 = vpop.f32.mrb[0].mxu0
        %503 = vmatprep.mubr.f32.mxu0 0.0
        %504 = vmatmul.mubr.f32.gmra.mrb[0].mxu0 %v355
        %v505 = vpop.f32.mrb[0].mxu0
        %v506 = vadd.f32 0.0, %v505
        %v507 = vpop.f32.mrb[0].mxu0
        %508 = vmatprep.mubr.f32.mxu0 0.0
        %509 = vmatmul.mubr.f32.gmra.mrb[0].mxu0 %v356
        %v510 = vpop.f32.mrb[0].mxu0
        %v511 = vadd.f32 0.0, %v510
        %v512 = vpop.f32.mrb[0].mxu0
        %513 = vmatprep.mubr.f32.mxu0 0.0
        %514 = vmatmul.mubr.f32.gmra.mrb[0].mxu0 %v357
        %v515 = vpop.f32.mrb[0].mxu0
        %v516 = vadd.f32 0.0, %v515
        %v517 = vpop.f32.mrb[0].mxu0
        %518 = vdwg.mxu0
        %v519 = vadd.f32 %v326, %v441
        %v520 = vadd.f32 %v327, %v446
        %v521 = vadd.f32 %v328, %v451
        %v522 = vadd.f32 %v329, %v456
        %v523 = vadd.f32 %v330, %v461
        %v524 = vadd.f32 %v331, %v466
        %v525 = vadd.f32 %v332, %v471
        %v526 = vadd.f32 %v333, %v476
        %v527 = vadd.f32 %v334, %v481
        %v528 = vadd.f32 %v335, %v486
        %v529 = vadd.f32 %v336, %v491
        %v530 = vadd.f32 %v337, %v496
        %v531 = vadd.f32 %v338, %v501
        %v532 = vadd.f32 %v339, %v506
        %v533 = vadd.f32 %v340, %v511
        %v534 = vadd.f32 %v341, %v516
        %vm535 = vcmask 261120
        %536 = vst.msk [vmem:[#allocation2] sm:$0xff] %vm535, %v519
        %537 = vst.msk [vmem:[#allocation2 + $0x8] sm:$0xff] %vm535, %v520
        %538 = vst.msk [vmem:[#allocation2 + $0x10] sm:$0xff] %vm535, %v521
        %539 = vst.msk [vmem:[#allocation2 + $0x18] sm:$0xff] %vm535, %v522
        %540 = vst.msk [vmem:[#allocation2 + $0x20] sm:$0xff] %vm535, %v523
        %541 = vst.msk [vmem:[#allocation2 + $0x28] sm:$0xff] %vm535, %v524
        %542 = vst.msk [vmem:[#allocation2 + $0x30] sm:$0xff] %vm535, %v525
        %543 = vst.msk [vmem:[#allocation2 + $0x38] sm:$0xff] %vm535, %v526
        %544 = vst.msk [vmem:[#allocation2 + $0x40] sm:$0xff] %vm535, %v527
        %545 = vst.msk [vmem:[#allocation2 + $0x48] sm:$0xff] %vm535, %v528
        %546 = vst.msk [vmem:[#allocation2 + $0x50] sm:$0xff] %vm535, %v529
        %547 = vst.msk [vmem:[#allocation2 + $0x58] sm:$0xff] %vm535, %v530
        %548 = vst.msk [vmem:[#allocation2 + $0x60] sm:$0xff] %vm535, %v531
        %549 = vst.msk [vmem:[#allocation2 + $0x68] sm:$0xff] %vm535, %v532
        %550 = vst.msk [vmem:[#allocation2 + $0x70] sm:$0xff] %vm535, %v533
        %551 = vst.msk [vmem:[#allocation2 + $0x78] sm:$0xff] %vm535, %v534
        %p552 = scmp.eq.s32.totalorder %s27, 2
        // Predicated region
        $region49: #{tpu_custom_call.1} parent=39 // pred_check
          %p553 = pneg %p552
        $region50: #{tpu_custom_call.1} parent=39 // pred_check_branch
          %555 = sbr.rel (%p553) target = $region52
        $region51: #{tpu_custom_call.1} parent=39 // pred_region
          %v556 = vld [vmem:[%s296] sm:$0xff]
          %v557 = vld [vmem:[%s296 + $0x8] sm:$0xff]
          %v558 = vld [vmem:[%s296 + $0x10] sm:$0xff]
          %v559 = vld [vmem:[%s296 + $0x18] sm:$0xff]
          %v560 = vld [vmem:[%s296 + $0x20] sm:$0xff]
          %v561 = vld [vmem:[%s296 + $0x28] sm:$0xff]
          %v562 = vld [vmem:[%s296 + $0x30] sm:$0xff]
          %v563 = vld [vmem:[%s296 + $0x38] sm:$0xff]
          %v564 = vld [vmem:[%s296 + $0x40] sm:$0xff]
          %v565 = vld [vmem:[%s296 + $0x48] sm:$0xff]
          %v566 = vld [vmem:[%s296 + $0x50] sm:$0xff]
          %v567 = vld [vmem:[%s296 + $0x58] sm:$0xff]
          %v568 = vld [vmem:[%s296 + $0x60] sm:$0xff]
          %v569 = vld [vmem:[%s296 + $0x68] sm:$0xff]
          %v570 = vld [vmem:[%s296 + $0x70] sm:$0xff]
          %v571 = vld [vmem:[%s296 + $0x78] sm:$0xff]
          %v572 = vld [vmem:[#allocation2] sm:$0xff]
          %v573 = vld [vmem:[#allocation2 + $0x8] sm:$0xff]
          %v574 = vld [vmem:[#allocation2 + $0x10] sm:$0xff]
          %v575 = vld [vmem:[#allocation2 + $0x18] sm:$0xff]
          %v576 = vld [vmem:[#allocation2 + $0x20] sm:$0xff]
          %v577 = vld [vmem:[#allocation2 + $0x28] sm:$0xff]
          %v578 = vld [vmem:[#allocation2 + $0x30] sm:$0xff]
          %v579 = vld [vmem:[#allocation2 + $0x38] sm:$0xff]
          %v580 = vld [vmem:[#allocation2 + $0x40] sm:$0xff]
          %v581 = vld [vmem:[#allocation2 + $0x48] sm:$0xff]
          %v582 = vld [vmem:[#allocation2 + $0x50] sm:$0xff]
          %v583 = vld [vmem:[#allocation2 + $0x58] sm:$0xff]
          %v584 = vld [vmem:[#allocation2 + $0x60] sm:$0xff]
          %v585 = vld [vmem:[#allocation2 + $0x68] sm:$0xff]
          %v586 = vld [vmem:[#allocation2 + $0x70] sm:$0xff]
          %v587 = vld [vmem:[#allocation2 + $0x78] sm:$0xff]
          %604 = vrot.lane.b32.xlu0 %v572, 32
          %v605 = vpop.permute.xlu0 %604
          %606 = vrot.lane.b32.xlu0 %v573, 32
          %v607 = vpop.permute.xlu0 %606
          %608 = vrot.lane.b32.xlu0 %v574, 32
          %v609 = vpop.permute.xlu0 %608
          %610 = vrot.lane.b32.xlu0 %v575, 32
          %v611 = vpop.permute.xlu0 %610
          %612 = vrot.lane.b32.xlu0 %v576, 32
          %v613 = vpop.permute.xlu0 %612
          %614 = vrot.lane.b32.xlu0 %v577, 32
          %v615 = vpop.permute.xlu0 %614
          %616 = vrot.lane.b32.xlu0 %v578, 32
          %v617 = vpop.permute.xlu0 %616
          %618 = vrot.lane.b32.xlu0 %v579, 32
          %v619 = vpop.permute.xlu0 %618
          %620 = vrot.lane.b32.xlu0 %v580, 32
          %v621 = vpop.permute.xlu0 %620
          %622 = vrot.lane.b32.xlu0 %v581, 32
          %v623 = vpop.permute.xlu0 %622
          %624 = vrot.lane.b32.xlu0 %v582, 32
          %v625 = vpop.permute.xlu0 %624
          %626 = vrot.lane.b32.xlu0 %v583, 32
          %v627 = vpop.permute.xlu0 %626
          %628 = vrot.lane.b32.xlu0 %v584, 32
          %v629 = vpop.permute.xlu0 %628
          %630 = vrot.lane.b32.xlu0 %v585, 32
          %v631 = vpop.permute.xlu0 %630
          %632 = vrot.lane.b32.xlu0 %v586, 32
          %v633 = vpop.permute.xlu0 %632
          %634 = vrot.lane.b32.xlu0 %v587, 32
          %v635 = vpop.permute.xlu0 %634
          %v652 = vsel %vm535, %v556, %v605
          %v653 = vsel %vm535, %v557, %v607
          %v654 = vsel %vm535, %v558, %v609
          %v655 = vsel %vm535, %v559, %v611
          %v656 = vsel %vm535, %v560, %v613
          %v657 = vsel %vm535, %v561, %v615
          %v658 = vsel %vm535, %v562, %v617
          %v659 = vsel %vm535, %v563, %v619
          %v660 = vsel %vm535, %v564, %v621
          %v661 = vsel %vm535, %v565, %v623
          %v662 = vsel %vm535, %v566, %v625
          %v663 = vsel %vm535, %v567, %v627
          %v664 = vsel %vm535, %v568, %v629
          %v665 = vsel %vm535, %v569, %v631
          %v666 = vsel %vm535, %v570, %v633
          %v667 = vsel %vm535, %v571, %v635
          %v668 = vld [vmem:[%s3] sm:$0xff]
          %v669 = vld [vmem:[%s3 + $0x8] sm:$0xff]
          %v670 = vld [vmem:[%s3 + $0x10] sm:$0xff]
          %v671 = vld [vmem:[%s3 + $0x18] sm:$0xff]
          %v672 = vld [vmem:[%s3 + $0x20] sm:$0xff]
          %v673 = vld [vmem:[%s3 + $0x28] sm:$0xff]
          %v674 = vld [vmem:[%s3 + $0x30] sm:$0xff]
          %v675 = vld [vmem:[%s3 + $0x38] sm:$0xff]
          %v676 = vld [vmem:[%s4] sm:$0x1]
          %v678 = vlaneseq
          %v679 = vshrl.u32 %v678, 7
          %v680 = vsub.s32 0, %v679
          %v681 = vrot.slane %v676, %v680
          %vm683 = vcmask 523264
          %v685 = vsel %vm683, %v652, 0
          %v688 = vsel %vm683, %v653, 0
          %v691 = vsel %vm683, %v654, 0
          %v694 = vsel %vm683, %v655, 0
          %v697 = vsel %vm683, %v656, 0
          %v700 = vsel %vm683, %v657, 0
          %v703 = vsel %vm683, %v658, 0
          %v706 = vsel %vm683, %v659, 0
          %v709 = vsel %vm683, %v660, 0
          %v712 = vsel %vm683, %v661, 0
          %v715 = vsel %vm683, %v662, 0
          %v718 = vsel %vm683, %v663, 0
          %v721 = vsel %vm683, %v664, 0
          %v724 = vsel %vm683, %v665, 0
          %v727 = vsel %vm683, %v666, 0
          %v730 = vsel %vm683, %v667, 0
          %732 = vmatprep.subr.mxu0 0.0
          %733 = vmatpush1.msra.mxu0 %v668
          %734 = vmatprep.subr.mxu0 0.0
          %735 = vmatpush1.msra.mxu0 %v669
          %736 = vmatprep.subr.mxu0 0.0
          %737 = vmatpush1.msra.mxu0 %v670
          %738 = vmatprep.subr.mxu0 0.0
          %739 = vmatpush1.msra.mxu0 %v671
          %740 = vmatprep.subr.mxu0 0.0
          %741 = vmatpush1.msra.mxu0 %v672
          %742 = vmatprep.subr.mxu0 0.0
          %743 = vmatpush1.msra.mxu0 %v673
          %744 = vmatprep.subr.mxu0 0.0
          %745 = vmatpush1.msra.mxu0 %v674
          %746 = vmatprep.subr.mxu0 0.0
          %747 = vmatpush1.msra.mxu0 %v675
          %748 = vmatprep.subr.mxu0 0.0
          %749 = vmatpush1.msra.mxu0 0.0
          %750 = vmatprep.subr.mxu0 0.0
          %751 = vmatpush1.msra.mxu0 0.0
          %752 = vmatprep.subr.mxu0 0.0
          %753 = vmatpush1.msra.mxu0 0.0
          %754 = vmatprep.subr.mxu0 0.0
          %755 = vmatpush1.msra.mxu0 0.0
          %756 = vmatprep.subr.mxu0 0.0
          %757 = vmatpush1.msra.mxu0 0.0
          %758 = vmatprep.subr.mxu0 0.0
          %759 = vmatpush1.msra.mxu0 0.0
          %760 = vmatprep.subr.mxu0 0.0
          %761 = vmatpush1.msra.mxu0 0.0
          %762 = vmatprep.subr.mxu0 0.0
          %763 = vmatpush1.msra.mxu0 0.0
          %764 = vmatprep.subr.mxu0 0.0
          %765 = vmatpush1.msra.mxu0 0.0
          %766 = vmatprep.subr.mxu0 0.0
          %767 = vmatpush1.msra.mxu0 0.0
          %768 = vmatprep.subr.mxu0 0.0
          %769 = vmatpush1.msra.mxu0 0.0
          %770 = vmatprep.subr.mxu0 0.0
          %771 = vmatpush1.msra.mxu0 0.0
          %772 = vmatprep.subr.mxu0 0.0
          %773 = vmatpush1.msra.mxu0 0.0
          %774 = vmatprep.subr.mxu0 0.0
          %775 = vmatpush1.msra.mxu0 0.0
          %776 = vmatprep.subr.mxu0 0.0
          %777 = vmatpush1.msra.mxu0 0.0
          %778 = vmatprep.subr.mxu0 0.0
          %779 = vmatpush1.msra.mxu0 0.0
          %780 = vmatprep.subr.mxu0 0.0
          %781 = vmatpush1.msra.mxu0 0.0
          %782 = vmatprep.subr.mxu0 0.0
          %783 = vmatpush1.msra.mxu0 0.0
          %784 = vmatprep.subr.mxu0 0.0
          %785 = vmatpush1.msra.mxu0 0.0
          %786 = vmatprep.subr.mxu0 0.0
          %787 = vmatpush1.msra.mxu0 0.0
          %788 = vmatprep.subr.mxu0 0.0
          %789 = vmatpush1.msra.mxu0 0.0
          %790 = vmatprep.subr.mxu0 0.0
          %791 = vmatpush1.msra.mxu0 0.0
          %792 = vmatprep.subr.mxu0 0.0
          %793 = vmatpush1.msra.mxu0 0.0
          %794 = vmatprep.subr.mxu0 0.0
          %795 = vmatpush1.msra.mxu0 0.0
          %796 = vmatprep.mubr.f32.mxu0 0.0
          %797 = vmatmul.mubr.f32.gmra.mrb[0].mxu0 %v685
          %v798 = vpop.f32.mrb[0].mxu0
          %v799 = vadd.f32 %v681, %v798
          %v800 = vpop.f32.mrb[0].mxu0
          %801 = vmatprep.mubr.f32.mxu0 0.0
          %802 = vmatmul.mubr.f32.gmra.mrb[0].mxu0 %v688
          %v803 = vpop.f32.mrb[0].mxu0
          %v804 = vadd.f32 %v681, %v803
          %v805 = vpop.f32.mrb[0].mxu0
          %806 = vmatprep.mubr.f32.mxu0 0.0
          %807 = vmatmul.mubr.f32.gmra.mrb[0].mxu0 %v691
          %v808 = vpop.f32.mrb[0].mxu0
          %v809 = vadd.f32 %v681, %v808
          %v810 = vpop.f32.mrb[0].mxu0
          %811 = vmatprep.mubr.f32.mxu0 0.0
          %812 = vmatmul.mubr.f32.gmra.mrb[0].mxu0 %v694
          %v813 = vpop.f32.mrb[0].mxu0
          %v814 = vadd.f32 %v681, %v813
          %v815 = vpop.f32.mrb[0].mxu0
          %816 = vmatprep.mubr.f32.mxu0 0.0
          %817 = vmatmul.mubr.f32.gmra.mrb[0].mxu0 %v697
          %v818 = vpop.f32.mrb[0].mxu0
          %v819 = vadd.f32 %v681, %v818
          %v820 = vpop.f32.mrb[0].mxu0
          %821 = vmatprep.mubr.f32.mxu0 0.0
          %822 = vmatmul.mubr.f32.gmra.mrb[0].mxu0 %v700
          %v823 = vpop.f32.mrb[0].mxu0
          %v824 = vadd.f32 %v681, %v823
          %v825 = vpop.f32.mrb[0].mxu0
          %826 = vmatprep.mubr.f32.mxu0 0.0
          %827 = vmatmul.mubr.f32.gmra.mrb[0].mxu0 %v703
          %v828 = vpop.f32.mrb[0].mxu0
          %v829 = vadd.f32 %v681, %v828
          %v830 = vpop.f32.mrb[0].mxu0
          %831 = vmatprep.mubr.f32.mxu0 0.0
          %832 = vmatmul.mubr.f32.gmra.mrb[0].mxu0 %v706
          %v833 = vpop.f32.mrb[0].mxu0
          %v834 = vadd.f32 %v681, %v833
          %v835 = vpop.f32.mrb[0].mxu0
          %836 = vmatprep.mubr.f32.mxu0 0.0
          %837 = vmatmul.mubr.f32.gmra.mrb[0].mxu0 %v709
          %v838 = vpop.f32.mrb[0].mxu0
          %v839 = vadd.f32 %v681, %v838
          %v840 = vpop.f32.mrb[0].mxu0
          %841 = vmatprep.mubr.f32.mxu0 0.0
          %842 = vmatmul.mubr.f32.gmra.mrb[0].mxu0 %v712
          %v843 = vpop.f32.mrb[0].mxu0
          %v844 = vadd.f32 %v681, %v843
          %v845 = vpop.f32.mrb[0].mxu0
          %846 = vmatprep.mubr.f32.mxu0 0.0
          %847 = vmatmul.mubr.f32.gmra.mrb[0].mxu0 %v715
          %v848 = vpop.f32.mrb[0].mxu0
          %v849 = vadd.f32 %v681, %v848
          %v850 = vpop.f32.mrb[0].mxu0
          %851 = vmatprep.mubr.f32.mxu0 0.0
          %852 = vmatmul.mubr.f32.gmra.mrb[0].mxu0 %v718
          %v853 = vpop.f32.mrb[0].mxu0
          %v854 = vadd.f32 %v681, %v853
          %v855 = vpop.f32.mrb[0].mxu0
          %856 = vmatprep.mubr.f32.mxu0 0.0
          %857 = vmatmul.mubr.f32.gmra.mrb[0].mxu0 %v721
          %v858 = vpop.f32.mrb[0].mxu0
          %v859 = vadd.f32 %v681, %v858
          %v860 = vpop.f32.mrb[0].mxu0
          %861 = vmatprep.mubr.f32.mxu0 0.0
          %862 = vmatmul.mubr.f32.gmra.mrb[0].mxu0 %v724
          %v863 = vpop.f32.mrb[0].mxu0
          %v864 = vadd.f32 %v681, %v863
          %v865 = vpop.f32.mrb[0].mxu0
          %866 = vmatprep.mubr.f32.mxu0 0.0
          %867 = vmatmul.mubr.f32.gmra.mrb[0].mxu0 %v727
          %v868 = vpop.f32.mrb[0].mxu0
          %v869 = vadd.f32 %v681, %v868
          %v870 = vpop.f32.mrb[0].mxu0
          %871 = vmatprep.mubr.f32.mxu0 0.0
          %872 = vmatmul.mubr.f32.gmra.mrb[0].mxu0 %v730
          %v873 = vpop.f32.mrb[0].mxu0
          %v874 = vadd.f32 %v681, %v873
          %v875 = vpop.f32.mrb[0].mxu0
          %876 = vdwg.mxu0
          %v877 = vmul.f32 %v799, %v799
          %v878 = vmul.f32 %v804, %v804
          %v879 = vmul.f32 %v809, %v809
          %v880 = vmul.f32 %v814, %v814
          %v881 = vmul.f32 %v819, %v819
          %v882 = vmul.f32 %v824, %v824
          %v883 = vmul.f32 %v829, %v829
          %v884 = vmul.f32 %v834, %v834
          %v885 = vmul.f32 %v839, %v839
          %v886 = vmul.f32 %v844, %v844
          %v887 = vmul.f32 %v849, %v849
          %v888 = vmul.f32 %v854, %v854
          %v889 = vmul.f32 %v859, %v859
          %v890 = vmul.f32 %v864, %v864
          %v891 = vmul.f32 %v869, %v869
          %v892 = vmul.f32 %v874, %v874
          %893 = vadd.xlane.f32.xlu0 %v877
          %v894 = vpop.xlane.xlu0 %893
          %895 = vadd.xlane.f32.xlu0 %v878
          %v896 = vpop.xlane.xlu0 %895
          %897 = vadd.xlane.f32.xlu0 %v879
          %v898 = vpop.xlane.xlu0 %897
          %899 = vadd.xlane.f32.xlu0 %v880
          %v900 = vpop.xlane.xlu0 %899
          %901 = vadd.xlane.f32.xlu0 %v881
          %v902 = vpop.xlane.xlu0 %901
          %903 = vadd.xlane.f32.xlu0 %v882
          %v904 = vpop.xlane.xlu0 %903
          %905 = vadd.xlane.f32.xlu0 %v883
          %v906 = vpop.xlane.xlu0 %905
          %907 = vadd.xlane.f32.xlu0 %v884
          %v908 = vpop.xlane.xlu0 %907
          %909 = vadd.xlane.f32.xlu0 %v885
          %v910 = vpop.xlane.xlu0 %909
          %911 = vadd.xlane.f32.xlu0 %v886
          %v912 = vpop.xlane.xlu0 %911
          %913 = vadd.xlane.f32.xlu0 %v887
          %v914 = vpop.xlane.xlu0 %913
          %915 = vadd.xlane.f32.xlu0 %v888
          %v916 = vpop.xlane.xlu0 %915
          %917 = vadd.xlane.f32.xlu0 %v889
          %v918 = vpop.xlane.xlu0 %917
          %919 = vadd.xlane.f32.xlu0 %v890
          %v920 = vpop.xlane.xlu0 %919
          %921 = vadd.xlane.f32.xlu0 %v891
          %v922 = vpop.xlane.xlu0 %921
          %923 = vadd.xlane.f32.xlu0 %v892
          %v924 = vpop.xlane.xlu0 %923
          %vm925 = vcmp.gt.f32.partialorder %v894, 0.0
          %vm926 = vcmp.gt.f32.partialorder %v896, 0.0
          %vm927 = vcmp.gt.f32.partialorder %v898, 0.0
          %vm928 = vcmp.gt.f32.partialorder %v900, 0.0
          %vm929 = vcmp.gt.f32.partialorder %v902, 0.0
          %vm930 = vcmp.gt.f32.partialorder %v904, 0.0
          %vm931 = vcmp.gt.f32.partialorder %v906, 0.0
          %vm932 = vcmp.gt.f32.partialorder %v908, 0.0
          %vm933 = vcmp.gt.f32.partialorder %v910, 0.0
          %vm934 = vcmp.gt.f32.partialorder %v912, 0.0
          %vm935 = vcmp.gt.f32.partialorder %v914, 0.0
          %vm936 = vcmp.gt.f32.partialorder %v916, 0.0
          %vm937 = vcmp.gt.f32.partialorder %v918, 0.0
          %vm938 = vcmp.gt.f32.partialorder %v920, 0.0
          %vm939 = vcmp.gt.f32.partialorder %v922, 0.0
          %vm940 = vcmp.gt.f32.partialorder %v924, 0.0
          %v941 = vrsqrt.pop %v894
          %v942 = vrsqrt.pop %v896
          %v943 = vrsqrt.pop %v898
          %v944 = vrsqrt.pop %v900
          %v945 = vrsqrt.pop %v902
          %v946 = vrsqrt.pop %v904
          %v947 = vrsqrt.pop %v906
          %v948 = vrsqrt.pop %v908
          %v949 = vrsqrt.pop %v910
          %v950 = vrsqrt.pop %v912
          %v951 = vrsqrt.pop %v914
          %v952 = vrsqrt.pop %v916
          %v953 = vrsqrt.pop %v918
          %v954 = vrsqrt.pop %v920
          %v955 = vrsqrt.pop %v922
          %v956 = vrsqrt.pop %v924
          %v957 = vsel %vm925, %v941, 0.0
          %v958 = vsel %vm926, %v942, 0.0
          %v959 = vsel %vm927, %v943, 0.0
          %v960 = vsel %vm928, %v944, 0.0
          %v961 = vsel %vm929, %v945, 0.0
          %v962 = vsel %vm930, %v946, 0.0
          %v963 = vsel %vm931, %v947, 0.0
          %v964 = vsel %vm932, %v948, 0.0
          %v965 = vsel %vm933, %v949, 0.0
          %v966 = vsel %vm934, %v950, 0.0
          %v967 = vsel %vm935, %v951, 0.0
          %v968 = vsel %vm936, %v952, 0.0
          %v969 = vsel %vm937, %v953, 0.0
          %v970 = vsel %vm938, %v954, 0.0
          %v971 = vsel %vm939, %v955, 0.0
          %v972 = vsel %vm940, %v956, 0.0
          %v973 = vmul.f32 %v799, %v957
          %v974 = vmul.f32 %v804, %v958
          %v975 = vmul.f32 %v809, %v959
          %v976 = vmul.f32 %v814, %v960
          %v977 = vmul.f32 %v819, %v961
          %v978 = vmul.f32 %v824, %v962
          %v979 = vmul.f32 %v829, %v963
          %v980 = vmul.f32 %v834, %v964
          %v981 = vmul.f32 %v839, %v965
          %v982 = vmul.f32 %v844, %v966
          %v983 = vmul.f32 %v849, %v967
          %v984 = vmul.f32 %v854, %v968
          %v985 = vmul.f32 %v859, %v969
          %v986 = vmul.f32 %v864, %v970
          %v987 = vmul.f32 %v869, %v971
          %v988 = vmul.f32 %v874, %v972
          %989 = vst [vmem:[%s290] sm:$0xff] %v973
          %990 = vst [vmem:[%s290 + $0x8] sm:$0xff] %v974
          %991 = vst [vmem:[%s290 + $0x10] sm:$0xff] %v975
          %992 = vst [vmem:[%s290 + $0x18] sm:$0xff] %v976
          %993 = vst [vmem:[%s290 + $0x20] sm:$0xff] %v977
          %994 = vst [vmem:[%s290 + $0x28] sm:$0xff] %v978
          %995 = vst [vmem:[%s290 + $0x30] sm:$0xff] %v979
          %996 = vst [vmem:[%s290 + $0x38] sm:$0xff] %v980
          %997 = vst [vmem:[%s290 + $0x40] sm:$0xff] %v981
          %998 = vst [vmem:[%s290 + $0x48] sm:$0xff] %v982
          %999 = vst [vmem:[%s290 + $0x50] sm:$0xff] %v983
          %1000 = vst [vmem:[%s290 + $0x58] sm:$0xff] %v984
          %1001 = vst [vmem:[%s290 + $0x60] sm:$0xff] %v985
          %1002 = vst [vmem:[%s290 + $0x68] sm:$0xff] %v986
          %1003 = vst [vmem:[%s290 + $0x70] sm:$0xff] %v987
          %1004 = vst [vmem:[%s290 + $0x78] sm:$0xff] %v988
        $region52: #{tpu_custom_call.1} parent=39 // pred_fallthru
          _
        %s1005 = sand.u32 %s164, 1
        %s1006 = scalar_lea.sflag [#allocation5], %s1005
        %s1007 = sand.u32 %s164, 1
        %s1008 = smul.addr %s1007, 128
        %s1009 = scalar_lea.vmem [#allocation6], %s1008
        // Predicated region
        $region53: #{tpu_custom_call.1} parent=39 // pred_check
          %p1010 = pneg %p174
        $region54: #{tpu_custom_call.1} parent=39 // pred_check_branch
          %1012 = sbr.rel (%p1010) target = $region56
        $region55: #{tpu_custom_call.1} parent=39 // pred_region
          %s1013 = smul.u32 16, %s26
          %s1015 = ssub.s32 2048, 2048
          %1016 = vsyncadd %s1006, %s1015
          %s1017 = smul.addr %s1013, 128
          %s1018 = scalar_lea.hbm %s5, %s1017
          %s1019 = sshll.u32 %s1009, 4
          %s1020 = int_to_ptr.vmem [resolvable:$true] %s1019
          %1025 = dma.vmem_to_hbm [thread:$0]  %s1020, 2048, %s1018, %s1006, 128, 128, 8
        $region56: #{tpu_custom_call.1} parent=39 // pred_fallthru
          _
      $region40: #{tpu_custom_call.1} parent=5 // pred_fallthru
        _
      %p1026 = scmp.le.s32.totalorder 2, %s17
      // Predicated region
      $region57: #{tpu_custom_call.1} parent=5 // pred_check
        %p1027 = pneg %p1026
      $region58: #{tpu_custom_call.1} parent=5 // pred_check_branch
        %1029 = sbr.rel (%p1027) target = $region60
      $region59: #{tpu_custom_call.1} parent=5 // pred_region
        %s1030 = ssub.s32 %s17, 2
        // Predicated region
        $region61: #{tpu_custom_call.1} parent=59 // pred_check
          %p1031 = pneg %p180
        $region62: #{tpu_custom_call.1} parent=59 // pred_check_branch
          %1033 = sbr.rel (%p1031) target = $region64
        $region63: #{tpu_custom_call.1} parent=59 // pred_region
          %s1034 = sand.u32 %s165, 1
          %s1035 = scalar_lea.sflag [#allocation5], %s1034
          %s1036 = sand.u32 %s165, 1
          %s1037 = smul.addr %s1036, 128
          %s1038 = scalar_lea.vmem [#allocation6], %s1037
          %1039 = dma.done %s1035, 2048
        $region64: #{tpu_custom_call.1} parent=59 // pred_fallthru
          _
      $region60: #{tpu_custom_call.1} parent=5 // pred_fallthru
        _
    $region6: #{tpu_custom_call.1} parent=1 // loop_footer
      %s21 = sadd.s32 1, %s17
    $region7: #{tpu_custom_call.1} parent=1 // loop_footer_branch
      %16 = sbr.rel target = $region3
    $region8: #{tpu_custom_call.1} parent=1 // loop_exit
      _
    %1040 = vsyncpa [#allocation4], 1
    %s1041 = scalar_lea.sflag [#allocation4], 1
    %1042 = vsyncpa %s1041, 1
    %1043 = vsyncpa [#allocation5], 1
    %s1044 = scalar_lea.sflag [#allocation5], 1
    %1045 = vsyncpa %s1044, 1

</llo_original>
